<compile_context>
chip_gen: v7x
topology: tpu7x:2x2x1
jax: 0.10.0
libtpu: 0.0.40
codegen_flags: <defaults>
</compile_context>

<pallas_src>
import jax
import jax.numpy as jnp
from jax.experimental import pallas as pl
from jax.experimental.pallas import tpu as pltpu


def _linear_flatten_kernel(x_ref, wb_ref, o_ref):
    # x:  (B, IN)       f32
    # wb: (IN+1, OUT)   f32  (rows 0..IN-1 = W^T, row IN = bias) — packed once in wrapper
    # o:  (B, OUT)      natural layout; flatten is done (for free) in the wrapper
    x = x_ref[...].astype(jnp.float32)
    in_features = x.shape[1]  # static

    # Start the accumulator at the bias row (fused bias add), then statically unroll the
    # tiny contraction on the VPU: (B,1)*(1,OUT) broadcasts -> 2 vmul + 2 vadd for IN=2.
    y = wb_ref[in_features:in_features + 1, :].astype(jnp.float32)        # (1, OUT)
    for k in range(in_features):                                          # unrolled at trace
        y = y + x[:, k:k + 1] * wb_ref[k:k + 1, :].astype(jnp.float32)    # (B, OUT)

    o_ref[...] = y.astype(o_ref.dtype)


def linear_flatten(x, weight, bias):
    """flatten(x @ weight.T + bias) via one gridless Pallas TPU kernel.

    x: (B, IN) f32; weight: (OUT, IN) PyTorch layout; bias: (OUT,).
    Returns a 1-D array of shape (B*OUT,).
    """
    B, IN = x.shape
    OUT = weight.shape[0]

    # Pack W^T and bias into a single small operand: cuts input DMAs from 3 to 2 and lets
    # the kernel fuse the bias add. Tiny (IN+1, OUT) build; folded/fused by XLA.
    wb = jnp.concatenate([weight.T, bias.reshape(1, OUT)], axis=0)         # (IN+1, OUT)

    y = pl.pallas_call(
        _linear_flatten_kernel,
        out_shape=jax.ShapeDtypeStruct((B, OUT), x.dtype),
        # Gridless: whole operands live in a single VMEM block each; no pipelining,
        # no double-buffering, no index_maps.
        in_specs=[
            pl.BlockSpec(memory_space=pltpu.MemorySpace.VMEM),
            pl.BlockSpec(memory_space=pltpu.MemorySpace.VMEM),
        ],
        out_specs=pl.BlockSpec(memory_space=pltpu.MemorySpace.VMEM),
    )(x, wb)

    # torch.cat over rows == flatten; an 8-element reshape of (B, OUT) is folded by XLA.
    return y.reshape(B * OUT)


if __name__ == "__main__":
    key = jax.random.PRNGKey(0)
    kx, kw, kb = jax.random.split(key, 3)

    # Module shapes: nn.Linear(2, 4); input x ~ (2, 2)
    B, IN, OUT = 2, 2, 4
    x = jax.random.normal(kx, (B, IN), dtype=jnp.float32)

    # Deterministic parameter init (uniform like PyTorch's default bound 1/sqrt(fan_in)).
    bound = 1.0 / jnp.sqrt(jnp.float32(IN))
    weight = jax.random.uniform(kw, (OUT, IN), dtype=jnp.float32, minval=-bound, maxval=bound)
    bias = jax.random.uniform(kb, (OUT,), dtype=jnp.float32, minval=-bound, maxval=bound)

    out = linear_flatten(x, weight, bias)
    jax.block_until_ready(out)

    # Reference check in plain JAX.
    ref = (x @ weight.T + bias).reshape(-1)
    assert out.shape == (B * OUT,)
    assert jnp.allclose(out, ref, atol=1e-5), "mismatch vs reference"

    print("KERNEL_OK")
</pallas_src>

<mosaic_0001>
module attributes {stable_mosaic.version = 11 : i64} {
  func.func @_linear_flatten_kernel(%arg0: memref<2x2xf32, #tpu.memory_space<vmem>>, %arg1: memref<3x4xf32, #tpu.memory_space<vmem>>, %arg2: memref<2x4xf32, #tpu.memory_space<vmem>>) attributes {dimension_semantics = [], scalar_prefetch = 0 : i64, scratch_operands = 0 : i64, tpu.core_type = #tpu.core_type<tc>} {
    %c0 = arith.constant 0 : index
    %c0_0 = arith.constant 0 : index
    %0 = vector.load %arg0[%c0, %c0_0] : memref<2x2xf32, #tpu.memory_space<vmem>>, vector<2x2xf32>
    %c2 = arith.constant 2 : index
    %c0_1 = arith.constant 0 : index
    %1 = vector.load %arg1[%c2, %c0_1] : memref<3x4xf32, #tpu.memory_space<vmem>>, vector<1x4xf32>
    %2 = vector.extract_strided_slice %0 {offsets = [0, 0], sizes = [2, 1], strides = [1, 1]} : vector<2x2xf32> to vector<2x1xf32>
    %c0_2 = arith.constant 0 : index
    %c0_3 = arith.constant 0 : index
    %3 = vector.load %arg1[%c0_2, %c0_3] : memref<3x4xf32, #tpu.memory_space<vmem>>, vector<1x4xf32>
    %4 = vector.broadcast %2 : vector<2x1xf32> to vector<2x4xf32>
    %5 = vector.broadcast %3 : vector<1x4xf32> to vector<2x4xf32>
    %6 = arith.mulf %4, %5 : vector<2x4xf32>
    %7 = vector.broadcast %1 : vector<1x4xf32> to vector<2x4xf32>
    %8 = arith.addf %7, %6 : vector<2x4xf32>
    %9 = vector.extract_strided_slice %0 {offsets = [0, 1], sizes = [2, 1], strides = [1, 1]} : vector<2x2xf32> to vector<2x1xf32>
    %c1 = arith.constant 1 : index
    %c0_4 = arith.constant 0 : index
    %10 = vector.load %arg1[%c1, %c0_4] : memref<3x4xf32, #tpu.memory_space<vmem>>, vector<1x4xf32>
    %11 = vector.broadcast %9 : vector<2x1xf32> to vector<2x4xf32>
    %12 = vector.broadcast %10 : vector<1x4xf32> to vector<2x4xf32>
    %13 = arith.mulf %11, %12 : vector<2x4xf32>
    %14 = arith.addf %8, %13 : vector<2x4xf32>
    %c0_5 = arith.constant 0 : index
    %c0_6 = arith.constant 0 : index
    %15 = vector.load %arg2[%c0_5, %c0_6] : memref<2x4xf32, #tpu.memory_space<vmem>>, vector<2x4xf32>
    tpu.vector_store %arg2[%c0_5, %c0_6], %14 {strides = array<i32>} : memref<2x4xf32, #tpu.memory_space<vmem>>, vector<2x4xf32>,
    return
  }
}

</mosaic_0001>

<llo_original>
// kernel: tpu_custom_call.1
$region0: #{tpu_custom_call.1}
  #allocation0 [shape = 'u32[]', space=smem, size = 0x4, offset = 0x4, fixed_abs, tag = 'smem constant byte address 0x4 - core index']
  #allocation1 [shape = 'u32[144,128]{1,0:T(1,128)}', space=vmem, size = 0x12000, scoped, tag = 'internal scratch']
  %s0 = inlined_call_operand.hbm [shape: f32[2,2], index: 0, kind: input, shape index: {}]
  %s1 = inlined_call_operand.hbm [shape: f32[3,4], index: 1, kind: input, shape index: {}]
  %s2 = inlined_call_operand.hbm [shape: f32[2,4], index: 2, kind: output, shape index: {}]
  %s3 = sld [smem:[#allocation0]]
  $region26: #{tpu_custom_call.1} parent=0
    _
  %s5 = ssub.s32 1, %s3
  %s6 = scalar_select 0, %s5, %s3
  $region1: #{tpu_custom_call.1} parent=0
    #allocation2 [shape = 'u8[1024]{0}', space=vmem, size = 0x400, scoped, tag = 'input window, operand 0, single buffered']
    #allocation3 [shape = 's32[1]{0}', space=sflag, size = 0x4, scoped, tag = 'scoped memory for tpu_custom_call.1']
    #allocation4 [shape = 's32[1]{0}', space=sflag, size = 0x4, scoped, tag = 'scoped memory for tpu_custom_call.1']
    #allocation5 [shape = 'u8[2048]{0}', space=vmem, size = 0x800, scoped, tag = 'input window, operand 1, single buffered']
    #allocation6 [shape = 's32[1]{0}', space=sflag, size = 0x4, scoped, tag = 'scoped memory for tpu_custom_call.1']
    #allocation7 [shape = 'u8[1024]{0}', space=vmem, size = 0x400, scoped, tag = 'output window, operand 0, single buffered']
    %7 = vsyncpa [#allocation3], 0
    %8 = vsyncpa [#allocation6], 0
    %9 = vsyncpa [#allocation4], 0
    // Predicated region
    $region2: #{tpu_custom_call.1} parent=1 // pred_check
      _
    $region3: #{tpu_custom_call.1} parent=1 // pred_check_branch
      %11 = sbr.rel (0) target = $region5
    $region4: #{tpu_custom_call.1} parent=1 // pred_region
      %s13 = ssub.s32 32, 32
      %14 = vsyncadd [#allocation3], %s13
      %s16 = sshll.u32 [#allocation2], 4
      %s17 = int_to_ptr.vmem [resolvable:$true] %s16
      %19 = dma.hbm_to_vmem [thread:$0]  %s0, 32, %s17, [#allocation3]
    $region5: #{tpu_custom_call.1} parent=1 // pred_fallthru
      _
    // Predicated region
    $region6: #{tpu_custom_call.1} parent=1 // pred_check
      _
    $region7: #{tpu_custom_call.1} parent=1 // pred_check_branch
      %21 = sbr.rel (0) target = $region9
    $region8: #{tpu_custom_call.1} parent=1 // pred_region
      %s23 = ssub.s32 64, 64
      %24 = vsyncadd [#allocation6], %s23
      %s26 = sshll.u32 [#allocation5], 4
      %s27 = int_to_ptr.vmem [resolvable:$true] %s26
      %29 = dma.hbm_to_vmem [thread:$0]  %s1, 64, %s27, [#allocation6]
    $region9: #{tpu_custom_call.1} parent=1 // pred_fallthru
      _
    // Predicated region
    $region10: #{tpu_custom_call.1} parent=1 // pred_check
      _
    $region11: #{tpu_custom_call.1} parent=1 // pred_check_branch
      %31 = sbr.rel (0) target = $region13
    $region12: #{tpu_custom_call.1} parent=1 // pred_region
      %32 = dma.done [#allocation3], 32
    $region13: #{tpu_custom_call.1} parent=1 // pred_fallthru
      _
    // Predicated region
    $region14: #{tpu_custom_call.1} parent=1 // pred_check
      _
    $region15: #{tpu_custom_call.1} parent=1 // pred_check_branch
      %34 = sbr.rel (0) target = $region17
    $region16: #{tpu_custom_call.1} parent=1 // pred_region
      %35 = dma.done [#allocation6], 64
    $region17: #{tpu_custom_call.1} parent=1 // pred_fallthru
      _
    %v36 = vld [vmem:[#allocation2] sm:$0x3]
    %v37 = vld [vmem:[#allocation5 + $0x2] sm:$0x1]
    %v38 = vld [vmem:[#allocation5] sm:$0x1]
    %40 = vset.pattern.permute.xlu0 0
    %41 = vperm.xlu0 %40, %v36
    %v42 = vpop.permute.xlu0 %41
    %v44 = vlaneseq
    %v45 = vshrl.u32 %v44, 7
    %v46 = vsub.s32 0, %v45
    %v47 = vrot.slane %v38, %v46
    %v48 = vmul.f32 %v42, %v47
    %v49 = vlaneseq
    %v50 = vshrl.u32 %v49, 7
    %v51 = vsub.s32 0, %v50
    %v52 = vrot.slane %v37, %v51
    %v53 = vadd.f32 %v52, %v48
    %v54 = vld [vmem:[#allocation5 + $0x1] sm:$0x1]
    %55 = vset.pattern.permute.xlu0 1
    %56 = vperm.xlu0 %55, %v36
    %v57 = vpop.permute.xlu0 %56
    %v59 = vlaneseq
    %v60 = vshrl.u32 %v59, 7
    %v61 = vsub.s32 0, %v60
    %v62 = vrot.slane %v54, %v61
    %v63 = vmul.f32 %v57, %v62
    %v64 = vadd.f32 %v53, %v63
    %vm65 = vcmask 25600
    %66 = vst.msk [vmem:[#allocation7] sm:$0x3] %vm65, %v64
    // Predicated region
    $region18: #{tpu_custom_call.1} parent=1 // pred_check
      _
    $region19: #{tpu_custom_call.1} parent=1 // pred_check_branch
      %68 = sbr.rel (0) target = $region21
    $region20: #{tpu_custom_call.1} parent=1 // pred_region
      %s70 = ssub.s32 32, 32
      %71 = vsyncadd [#allocation4], %s70
      %s73 = sshll.u32 [#allocation7], 4
      %s74 = int_to_ptr.vmem [resolvable:$true] %s73
      %76 = dma.vmem_to_hbm [thread:$0]  %s74, 32, %s2, [#allocation4]
    $region21: #{tpu_custom_call.1} parent=1 // pred_fallthru
      _
    // Predicated region
    $region22: #{tpu_custom_call.1} parent=1 // pred_check
      _
    $region23: #{tpu_custom_call.1} parent=1 // pred_check_branch
      %78 = sbr.rel (0) target = $region25
    $region24: #{tpu_custom_call.1} parent=1 // pred_region
      %79 = dma.done [#allocation4], 32
    $region25: #{tpu_custom_call.1} parent=1 // pred_fallthru
      _
    %80 = vsyncpa [#allocation3], 1
    %81 = vsyncpa [#allocation6], 1
    %82 = vsyncpa [#allocation4], 1

</llo_original>
